<compile_context>
chip_gen: v5e
topology: v5e:2x2
jax: 0.10.0
libtpu: 0.0.40
codegen_flags: <defaults>
</compile_context>

<pallas_src>
import functools
import math

import jax
import jax.numpy as jnp
from jax.experimental import pallas as pl
from jax.experimental.pallas import tpu as pltpu


def _round_up(x, m):
    return ((x + m - 1) // m) * m


def _softplus(x):
    # Numerically stable everywhere: max(x,0) + log1p(exp(-|x|)). VPU + EUP ops.
    return jnp.maximum(x, 0.0) + jnp.log1p(jnp.exp(-jnp.abs(x)))


def _selective_param_kernel(x_ref, w_ref, b_ref, o_ref, *, dt_cols):
    x = x_ref[...]                                               # (TM, D)
    # Single fused matmul -> lane-dense (TM, Fpad) slab; bias is zero outside
    # the dt columns so adding it everywhere is a no-op for B/C/pad columns.
    slab = jnp.dot(x, w_ref[...],
                   preferred_element_type=jnp.float32) + b_ref[...]
    cols = jax.lax.broadcasted_iota(jnp.int32, slab.shape, dimension=1)
    o_ref[...] = jnp.where(cols < dt_cols, _softplus(slab), slab)


def selective_parameterization(x, params, *, tm=512):
    """x: (batch, seq_len, input_dim) float32 -> dict of SSM params."""
    Bsz, L, D = x.shape
    N = params["W_B"].shape[1]
    M = Bsz * L

    # ---- fused, lane-padded weight / bias (layout plumbing, done once) ----
    F = D + 2 * N
    Fpad = _round_up(F, 128)
    W_fused = jnp.concatenate(
        [params["W_dt"], params["W_B"], params["W_C"]], axis=1)     # (D, F)
    W_fused = jnp.pad(W_fused, ((0, 0), (0, Fpad - F)))             # (D, Fpad)
    b_fused = jnp.pad(params["b_dt"].reshape(1, D),
                      ((0, 0), (0, Fpad - D)))                      # (1, Fpad)

    # ---- tile the row axis; pad M so every block is full ----
    TM = min(tm, _round_up(M, 8))        # multiple of 8 sublanes
    Mpad = _round_up(M, TM)
    x_flat = x.reshape(M, D)
    if Mpad != M:
        x_flat = jnp.pad(x_flat, ((0, Mpad - M), (0, 0)))
    grid = (Mpad // TM,)

    # VMEM budget: double-buffered x & output tiles + resident weights/bias,
    # with 2x headroom, clamped to the always-safe [16 MiB, 128 MiB] range.
    tile_bytes = 4 * (2 * TM * D + 2 * TM * Fpad + 2 * D * Fpad + 2 * Fpad)
    vmem_budget = max(16 * 1024 * 1024, min(128 * 1024 * 1024, 2 * tile_bytes))

    slab = pl.pallas_call(
        functools.partial(_selective_param_kernel, dt_cols=D),
        out_shape=jax.ShapeDtypeStruct((Mpad, Fpad), jnp.float32),
        grid_spec=pltpu.PrefetchScalarGridSpec(
            num_scalar_prefetch=0,
            grid=grid,
            in_specs=[
                pl.BlockSpec((TM, D), lambda i: (i, 0)),     # x tile (pipelined)
                pl.BlockSpec((D, Fpad), lambda i: (0, 0)),   # fused weight (resident)
                pl.BlockSpec((1, Fpad), lambda i: (0, 0)),   # fused bias (resident)
            ],
            out_specs=pl.BlockSpec((TM, Fpad), lambda i: (i, 0)),
        ),
        compiler_params=pltpu.CompilerParams(
            dimension_semantics=("parallel",),   # megacore shard on v7x
            vmem_limit_bytes=vmem_budget,
        ),
    )(x_flat, W_fused, b_fused)

    # wrapper-side un-pad / split (cheap XLA slices, not extra compute)
    slab = slab[:M]
    dt = slab[:, :D].reshape(Bsz, L, D)
    Bmat = slab[:, D:D + N].reshape(Bsz, L, N)
    Cmat = slab[:, D + N:D + 2 * N].reshape(Bsz, L, N)

    # input-independent parameters (parameter setup glue, not the hot path)
    A = -jnp.exp(params["A_log"])          # (D, N)
    D_param = params["D"]                  # (D,)

    return {"A": A, "B": Bmat, "C": Cmat, "D": D_param, "dt": dt}


def init_params(key, input_dim, state_dim):
    k_dt, k_b, k_c = jax.random.split(key, 3)
    scale = 1.0 / math.sqrt(input_dim)
    W_dt = jax.random.uniform(k_dt, (input_dim, input_dim), jnp.float32,
                              minval=-scale, maxval=scale)
    W_B = jax.random.uniform(k_b, (input_dim, state_dim), jnp.float32,
                             minval=-scale, maxval=scale)
    W_C = jax.random.uniform(k_c, (input_dim, state_dim), jnp.float32,
                             minval=-scale, maxval=scale)
    b_dt = jnp.zeros((1, input_dim), jnp.float32)
    # S4D-real style init for A_log, D = ones
    A_log = jnp.log(jnp.broadcast_to(
        jnp.arange(1, state_dim + 1, dtype=jnp.float32),
        (input_dim, state_dim)))
    D_param = jnp.ones((input_dim,), jnp.float32)
    return {"W_dt": W_dt, "b_dt": b_dt, "W_B": W_B, "W_C": W_C,
            "A_log": A_log, "D": D_param}


def _reference(x, params):
    dt = _softplus(jnp.einsum("bld,de->ble", x, params["W_dt"]) + params["b_dt"][0])
    B = jnp.einsum("bld,dn->bln", x, params["W_B"])
    C = jnp.einsum("bld,dn->bln", x, params["W_C"])
    return {"A": -jnp.exp(params["A_log"]), "B": B, "C": C,
            "D": params["D"], "dt": dt}


if __name__ == "__main__":
    batch, seq_len, input_dim, state_dim = 2, 8, 32, 16

    key = jax.random.PRNGKey(0)
    k_x, k_p = jax.random.split(key)
    x = jax.random.normal(k_x, (batch, seq_len, input_dim), dtype=jnp.float32)
    params = init_params(k_p, input_dim, state_dim)

    out = selective_parameterization(x, params)
    jax.block_until_ready(out)

    ref = _reference(x, params)
    for name in ("A", "B", "C", "D", "dt"):
        assert out[name].shape == ref[name].shape, name
        assert jnp.allclose(out[name], ref[name], atol=1e-5, rtol=1e-5), name

    print("KERNEL_OK")
</pallas_src>

<mosaic_0001>
module attributes {stable_mosaic.version = 11 : i64} {
  func.func @_selective_param_kernel(%arg0: i32, %arg1: memref<16x32xf32, #tpu.memory_space<vmem>>, %arg2: memref<32x128xf32, #tpu.memory_space<vmem>>, %arg3: memref<1x128xf32, #tpu.memory_space<vmem>>, %arg4: memref<16x128xf32, #tpu.memory_space<vmem>>) attributes {dimension_semantics = [#tpu.dimension_semantics<parallel>], iteration_bounds = array<i64: 1>, scalar_prefetch = 0 : i64, scratch_operands = 0 : i64, tpu.core_type = #tpu.core_type<tc>, window_params = [{transform_indices = @transform_0, window_bounds = array<i64: 16, 32>}, {pipeline_mode = #tpu.pipeline_mode<synchronous>, transform_indices = @transform_1, window_bounds = array<i64: 32, 128>}, {pipeline_mode = #tpu.pipeline_mode<synchronous>, transform_indices = @transform_2, window_bounds = array<i64: 1, 128>}, {transform_indices = @transform_3, window_bounds = array<i64: 16, 128>}]} {
    %c0 = arith.constant 0 : index
    %c0_0 = arith.constant 0 : index
    %0 = vector.load %arg1[%c0, %c0_0] : memref<16x32xf32, #tpu.memory_space<vmem>>, vector<16x32xf32>
    %c0_1 = arith.constant 0 : index
    %c0_2 = arith.constant 0 : index
    %1 = vector.load %arg2[%c0_1, %c0_2] : memref<32x128xf32, #tpu.memory_space<vmem>>, vector<32x128xf32>
    %cst = arith.constant dense<0.000000e+00> : vector<16x128xf32>
    %2 = tpu.matmul %0, %1, %cst {dimension_numbers = #tpu.dot_dimension_numbers<[1], [0], [0], [1], [0, 0, 1, 1], [], []>} : vector<16x32xf32>, vector<32x128xf32>, vector<16x128xf32> -> vector<16x128xf32>
    %c0_3 = arith.constant 0 : index
    %c0_4 = arith.constant 0 : index
    %3 = vector.load %arg3[%c0_3, %c0_4] : memref<1x128xf32, #tpu.memory_space<vmem>>, vector<1x128xf32>
    %4 = vector.broadcast %3 : vector<1x128xf32> to vector<16x128xf32>
    %5 = arith.addf %2, %4 : vector<16x128xf32>
    %6 = tpu.iota {dimensions = array<i32: 1>} : vector<16x128xi32>
    %c32_i32 = arith.constant 32 : i32
    %7 = vector.broadcast %c32_i32 : i32 to vector<16x128xi32>
    %8 = arith.cmpi slt, %6, %7 : vector<16x128xi32>
    %cst_5 = arith.constant 0.000000e+00 : f32
    %9 = vector.broadcast %cst_5 : f32 to vector<16x128xf32>
    %10 = arith.maximumf %5, %9 : vector<16x128xf32>
    %11 = math.absf %5 : vector<16x128xf32>
    %cst_6 = arith.constant 0.000000e+00 : f32
    %12 = vector.broadcast %cst_6 : f32 to vector<16x128xf32>
    %13 = arith.subf %12, %11 : vector<16x128xf32>
    %14 = math.exp %13 : vector<16x128xf32>
    %15 = math.log1p %14 : vector<16x128xf32>
    %16 = arith.addf %10, %15 : vector<16x128xf32>
    %17 = arith.select %8, %16, %5 : vector<16x128xi1>, vector<16x128xf32>
    %c0_7 = arith.constant 0 : index
    %c0_8 = arith.constant 0 : index
    %18 = vector.load %arg4[%c0_7, %c0_8] : memref<16x128xf32, #tpu.memory_space<vmem>>, vector<16x128xf32>
    tpu.vector_store %arg4[%c0_7, %c0_8], %17 {strides = array<i32>} : memref<16x128xf32, #tpu.memory_space<vmem>>, vector<16x128xf32>,
    return
  }
  func.func @transform_0(%arg0: i32) -> (i32, i32) {
    %c0_i32 = arith.constant 0 : i32
    %c0_i32_0 = arith.constant 0 : i32
    return %arg0, %c0_i32 : i32, i32
  }
  func.func @transform_1(%arg0: i32) -> (i32, i32) {
    %c0_i32 = arith.constant 0 : i32
    %c0_i32_0 = arith.constant 0 : i32
    %c0_i32_1 = arith.constant 0 : i32
    return %c0_i32, %c0_i32_0 : i32, i32
  }
  func.func @transform_2(%arg0: i32) -> (i32, i32) {
    %c0_i32 = arith.constant 0 : i32
    %c0_i32_0 = arith.constant 0 : i32
    %c0_i32_1 = arith.constant 0 : i32
    return %c0_i32, %c0_i32_0 : i32, i32
  }
  func.func @transform_3(%arg0: i32) -> (i32, i32) {
    %c0_i32 = arith.constant 0 : i32
    %c0_i32_0 = arith.constant 0 : i32
    return %arg0, %c0_i32 : i32, i32
  }
}

</mosaic_0001>

<llo_original>
// kernel: tpu_custom_call.1
$region0: #{tpu_custom_call.1}
  #allocation0 [shape = 'u32[]', space=smem, size = 0x4, offset = 0x4, fixed_abs, tag = 'smem constant byte address 0x4 - core index']
  #allocation1 [shape = 'u32[72,128]{1,0:T(1,128)}', space=vmem, size = 0x9000, scoped, tag = 'internal scratch']
  %s0 = inlined_call_operand.hbm [shape: f32[16,32], index: 0, kind: input, shape index: {}]
  %s1 = inlined_call_operand.hbm [shape: f32[32,128], index: 1, kind: input, shape index: {}]
  %s2 = inlined_call_operand.vmem [shape: f32[1,128], index: 2, kind: input, shape index: {}]
  %s3 = inlined_call_operand.hbm [shape: f32[16,128], index: 3, kind: output, shape index: {}]
  %s4 = sld [smem:[#allocation0]]
  $region30: #{tpu_custom_call.1} parent=0
    _
  %s6 = ssub.s32 1, %s4
  %s7 = scalar_select 0, %s6, %s4
  $region1: #{tpu_custom_call.1} parent=0
    #allocation2 [shape = 'u8[8192]{0}', space=vmem, size = 0x2000, scoped, tag = 'input window, operand 0, single buffered']
    #allocation3 [shape = 's32[1]{0}', space=sflag, size = 0x4, scoped, tag = 'scoped memory for tpu_custom_call.1']
    #allocation4 [shape = 's32[1]{0}', space=sflag, size = 0x4, scoped, tag = 'scoped memory for tpu_custom_call.1']
    #allocation5 [shape = 'u8[16384]{0}', space=vmem, size = 0x4000, scoped, tag = 'input window, operand 1, single buffered']
    #allocation6 [shape = 's32[1]{0}', space=sflag, size = 0x4, scoped, tag = 'scoped memory for tpu_custom_call.1']
    #allocation7 [shape = 'u8[8192]{0}', space=vmem, size = 0x2000, scoped, tag = 'output window, operand 0, single buffered']
    %8 = vsyncpa [#allocation3], 0
    %9 = vsyncpa [#allocation6], 0
    %10 = vsyncpa [#allocation4], 0
    // Predicated region
    $region2: #{tpu_custom_call.1} parent=1 // pred_check
      _
    $region3: #{tpu_custom_call.1} parent=1 // pred_check_branch
      %12 = sbr.rel (0) target = $region5
    $region4: #{tpu_custom_call.1} parent=1 // pred_region
      %14 = vsyncadd [#allocation3], 0
      %s15 = sshll.u32 %s0, 4
      %s16 = int_to_ptr.hbm [resolvable:$true] %s15
      %s17 = sshll.u32 [#allocation2], 4
      %s18 = int_to_ptr.vmem [resolvable:$true] %s17
      %23 = dma.hbm_to_vmem [thread:$0]  %s16, 256, %s18, [#allocation3], 128, 128, 8
    $region5: #{tpu_custom_call.1} parent=1 // pred_fallthru
      _
    // Predicated region
    $region6: #{tpu_custom_call.1} parent=1 // pred_check
      _
    $region7: #{tpu_custom_call.1} parent=1 // pred_check_branch
      %25 = sbr.rel (0) target = $region9
    $region8: #{tpu_custom_call.1} parent=1 // pred_region
      %27 = vsyncadd [#allocation6], 0
      %s28 = sshll.u32 %s1, 4
      %s29 = int_to_ptr.hbm [resolvable:$true] %s28
      %s30 = sshll.u32 [#allocation5], 4
      %s31 = int_to_ptr.vmem [resolvable:$true] %s30
      %36 = dma.hbm_to_vmem [thread:$0]  %s29, 512, %s31, [#allocation6], 128, 128, 8
    $region9: #{tpu_custom_call.1} parent=1 // pred_fallthru
      _
    // Predicated region
    $region10: #{tpu_custom_call.1} parent=1 // pred_check
      _
    $region11: #{tpu_custom_call.1} parent=1 // pred_check_branch
      %38 = sbr.rel (0) target = $region13
    $region12: #{tpu_custom_call.1} parent=1 // pred_region
      _
    $region13: #{tpu_custom_call.1} parent=1 // pred_fallthru
      _
    // Predicated region
    $region14: #{tpu_custom_call.1} parent=1 // pred_check
      _
    $region15: #{tpu_custom_call.1} parent=1 // pred_check_branch
      %40 = sbr.rel (0) target = $region17
    $region16: #{tpu_custom_call.1} parent=1 // pred_region
      %42 = dma.done [#allocation3], 256
    $region17: #{tpu_custom_call.1} parent=1 // pred_fallthru
      _
    // Predicated region
    $region18: #{tpu_custom_call.1} parent=1 // pred_check
      _
    $region19: #{tpu_custom_call.1} parent=1 // pred_check_branch
      %44 = sbr.rel (0) target = $region21
    $region20: #{tpu_custom_call.1} parent=1 // pred_region
      %46 = dma.done [#allocation6], 512
    $region21: #{tpu_custom_call.1} parent=1 // pred_fallthru
      _
    %v47 = vld [vmem:[#allocation2] sm:$0xff]
    %v48 = vld [vmem:[#allocation2 + $0x8] sm:$0xff]
    %v49 = vld [vmem:[#allocation5] sm:$0xff]
    %v50 = vld [vmem:[#allocation5 + $0x8] sm:$0xff]
    %v51 = vld [vmem:[#allocation5 + $0x10] sm:$0xff]
    %v52 = vld [vmem:[#allocation5 + $0x18] sm:$0xff]
    %v53 = vld [vmem:[%s2] sm:$0x1]
    %v55 = vperm.slane %v53, 0
    %vm57 = vcmask 261120
    %v59 = vsel %vm57, %v47, 0
    %v62 = vsel %vm57, %v48, 0
    %64 = vmatpush.msra.mxu0 0.0
    %65 = vmatpush.msra.mxu0 0.0
    %66 = vmatpush.msra.mxu0 0.0
    %67 = vmatpush.msra.mxu0 0.0
    %68 = vmatpush.msra.mxu0 0.0
    %69 = vmatpush.msra.mxu0 0.0
    %70 = vmatpush.msra.mxu0 0.0
    %71 = vmatpush.msra.mxu0 0.0
    %72 = vmatpush.msra.mxu0 0.0
    %73 = vmatpush.msra.mxu0 0.0
    %74 = vmatpush.msra.mxu0 0.0
    %75 = vmatpush.msra.mxu0 0.0
    %76 = vmatpush.msra.mxu0 %v52
    %77 = vmatpush.msra.mxu0 %v51
    %78 = vmatpush.msra.mxu0 %v50
    %79 = vmatpush.msra.mxu0 %v49
    %80 = vmatmul.f32.gmra.mxu0 %v59
    %v81 = vpop.f32.mrf.mxu0
    %v82 = vadd.f32 %v55, %v81
    %83 = vmatmul.f32.gmra.mxu0 %v62
    %v84 = vpop.f32.mrf.mxu0
    %v85 = vadd.f32 %v55, %v84
    %86 = vdwg.mxu0
    %v87 = vlaneseq
    %v88 = vand.u32 %v87, 127
    %vm89 = vcmp.lt.s32.totalorder %v88, 32
    %v90 = vmax.f32 %v82, 0.0
    %v91 = vmax.f32 %v85, 0.0
    %v92 = vand.u32 2147483647, %v82
    %v93 = vand.u32 2147483647, %v85
    %v94 = vsub.f32 0.0, %v92
    %v95 = vsub.f32 0.0, %v93
    %v96 = vmul.f32 %v94, 1.442695
    %v97 = vpow.pop %v96
    %v98 = vmul.f32 %v95, 1.442695
    %v99 = vpow.pop %v98
    %v100 = vadd.f32 %v97, 1.0
    %v101 = vlog2.pop %v100
    %v102 = vmul.f32 %v101, 0.6931472
    %v103 = vmul.f32 -0.5, %v97
    %v104 = vadd.f32 %v103, 1.0
    %v105 = vmul.f32 %v104, %v97
    %v106 = vand.u32 2147483647, %v97
    %vm107 = vcmp.lt.f32.partialorder %v106, 0.0004427343
    %v108 = vsel %vm107, %v105, %v102
    %v109 = vadd.f32 %v99, 1.0
    %v110 = vlog2.pop %v109
    %v111 = vmul.f32 %v110, 0.6931472
    %v112 = vmul.f32 -0.5, %v99
    %v113 = vadd.f32 %v112, 1.0
    %v114 = vmul.f32 %v113, %v99
    %v115 = vand.u32 2147483647, %v99
    %vm116 = vcmp.lt.f32.partialorder %v115, 0.0004427343
    %v117 = vsel %vm116, %v114, %v111
    %v118 = vadd.f32 %v90, %v108
    %v119 = vadd.f32 %v91, %v117
    %v120 = vsel %vm89, %v118, %v82
    %v121 = vsel %vm89, %v119, %v85
    %122 = vst [vmem:[#allocation7] sm:$0xff] %v120
    %123 = vst [vmem:[#allocation7 + $0x8] sm:$0xff] %v121
    // Predicated region
    $region22: #{tpu_custom_call.1} parent=1 // pred_check
      _
    $region23: #{tpu_custom_call.1} parent=1 // pred_check_branch
      %125 = sbr.rel (0) target = $region25
    $region24: #{tpu_custom_call.1} parent=1 // pred_region
      %127 = vsyncadd [#allocation4], 0
      %s128 = sshll.u32 [#allocation7], 4
      %s129 = int_to_ptr.vmem [resolvable:$true] %s128
      %s130 = sshll.u32 %s3, 4
      %s131 = int_to_ptr.hbm [resolvable:$true] %s130
      %136 = dma.vmem_to_hbm [thread:$0]  %s129, 256, %s131, [#allocation4], 128, 128, 8
    $region25: #{tpu_custom_call.1} parent=1 // pred_fallthru
      _
    // Predicated region
    $region26: #{tpu_custom_call.1} parent=1 // pred_check
      _
    $region27: #{tpu_custom_call.1} parent=1 // pred_check_branch
      %138 = sbr.rel (0) target = $region29
    $region28: #{tpu_custom_call.1} parent=1 // pred_region
      %140 = dma.done [#allocation4], 256
    $region29: #{tpu_custom_call.1} parent=1 // pred_fallthru
      _
    %141 = vsyncpa [#allocation3], 1
    %142 = vsyncpa [#allocation6], 1
    %143 = vsyncpa [#allocation4], 1

</llo_original>
